<compile_context>
chip_gen: v5e
topology: v5e:2x2
jax: 0.10.0
libtpu: 0.0.40
codegen_flags: <defaults>
</compile_context>

<pallas_src>
import jax
import jax.numpy as jnp
from jax.experimental import pallas as pl
from jax.experimental.pallas import tpu as pltpu

LANES = 128
MAX_TILE_ROWS = 8192           # (8192, 128) f32 = 4 MiB per buffer
MIN_GRID_STEPS = 4             # keep a few steps for pipelining / megacore sharding
SMALL_N_FAST_PATH = 128 * 1024 # below ~one tile of elements, plain XLA wins


def _round_up(a, b):
    return ((a + b - 1) // b) * b


def linear_kernel(w_ref, b_ref, x_ref, o_ref):
    # w_ref, b_ref: (1,) f32 scalars in SMEM.
    # x_ref, o_ref: (tile_rows, 128) tiles in VMEM.
    # nn.Linear(1, 1): y = x * w + b  -> single VPU fused multiply-add per vreg.
    w = w_ref[0]
    b = b_ref[0]
    o_ref[...] = (x_ref[...].astype(jnp.float32) * w + b).astype(o_ref.dtype)


def regression_forward(x, weight, bias):
    """x: (N, 1), weight: (1, 1), bias: (1,) -> (N, 1) = x @ W^T + b."""
    n = x.shape[0]
    out_dtype = x.dtype

    # Parameters kept in f32 (no silent downcast to the streaming dtype).
    w32 = weight.astype(jnp.float32).reshape(())
    b32 = bias.astype(jnp.float32).reshape(())

    # ---- small-N fast path: a fused XLA elementwise op beats kernel launch ----
    if n < SMALL_N_FAST_PATH:
        return (x.astype(jnp.float32) * w32 + b32).astype(out_dtype)

    x_flat = x.reshape(-1)

    # Lane-aligned prefix goes through the kernel; the <128-element tail is XLA.
    n_main = (n // LANES) * LANES
    rows = n_main // LANES

    # Largest tile that (a) fits the explicit 32 MiB VMEM budget double-buffered
    # and (b) still leaves >= MIN_GRID_STEPS grid steps.
    tile_rows = max(8, min(MAX_TILE_ROWS,
                           _round_up(pl.cdiv(rows, MIN_GRID_STEPS), 8)))
    grid = (pl.cdiv(rows, tile_rows),)  # ragged last block is edge-masked by Pallas

    x_main = x_flat[:n_main].reshape(rows, LANES)  # pad-free lane-dense view
    w_s = w32.reshape(1)                           # (1,) f32 scalar -> SMEM
    b_s = b32.reshape(1)

    y_main = pl.pallas_call(
        linear_kernel,
        out_shape=jax.ShapeDtypeStruct((rows, LANES), out_dtype),
        grid_spec=pltpu.PrefetchScalarGridSpec(
            num_scalar_prefetch=0,
            grid=grid,
            in_specs=[
                pl.BlockSpec(memory_space=pltpu.MemorySpace.SMEM),   # weight scalar
                pl.BlockSpec(memory_space=pltpu.MemorySpace.SMEM),   # bias scalar
                pl.BlockSpec((tile_rows, LANES), lambda i: (i, 0)),  # x row tile
            ],
            out_specs=pl.BlockSpec((tile_rows, LANES), lambda i: (i, 0)),
        ),
        compiler_params=pltpu.CompilerParams(
            # "parallel" -> shard row tiles across the 2 TensorCores on v7x;
            # neutral on v5e/v6e (single TC).
            dimension_semantics=("parallel",),
            # Explicit budget: 16 MiB of double-buffered tiles + headroom, safe on
            # v5e/v6e (128 MiB) and v7x (64 MiB/TC).
            vmem_limit_bytes=32 * 1024 * 1024,
        ),
    )(w_s, b_s, x_main)

    y_flat = y_main.reshape(-1)
    if n_main == n:
        return y_flat.reshape(n, 1)

    y_tail = (x_flat[n_main:].astype(jnp.float32) * w32 + b32).astype(out_dtype)
    return jnp.concatenate([y_flat, y_tail]).reshape(n, 1)


if __name__ == "__main__":
    key = jax.random.PRNGKey(0)
    kx, kw, kb = jax.random.split(key, 3)

    weight = jax.random.uniform(kw, (1, 1), dtype=jnp.float32, minval=-1.0, maxval=1.0)
    bias = jax.random.uniform(kb, (1,), dtype=jnp.float32, minval=-1.0, maxval=1.0)

    # 1) tiny batch like the module's typical use  -> small-N fast path (pure XLA)
    # 2) lane-aligned larger batch                 -> Pallas kernel, pad-free, no tail
    # 3) ragged larger batch                       -> Pallas kernel + <128-elem XLA tail
    for n in (8, 2 * SMALL_N_FAST_PATH, 2 * SMALL_N_FAST_PATH + 77):
        x = jax.random.normal(jax.random.fold_in(kx, n), (n, 1), dtype=jnp.float32)
        out = jax.block_until_ready(regression_forward(x, weight, bias))
        ref = x @ weight.T + bias
        assert out.shape == (n, 1)
        assert jnp.allclose(out, ref, atol=1e-5, rtol=1e-5)

    print("KERNEL_OK")
</pallas_src>

<mosaic_0001>
module attributes {stable_mosaic.version = 11 : i64} {
  func.func @linear_kernel(%arg0: i32, %arg1: memref<1xf32, #tpu.memory_space<smem>>, %arg2: memref<1xf32, #tpu.memory_space<smem>>, %arg3: memref<512x128xf32, #tpu.memory_space<vmem>>, %arg4: memref<512x128xf32, #tpu.memory_space<vmem>>) attributes {dimension_semantics = [#tpu.dimension_semantics<parallel>], iteration_bounds = array<i64: 4>, scalar_prefetch = 0 : i64, scratch_operands = 0 : i64, tpu.core_type = #tpu.core_type<tc>, window_params = [{transform_indices = @transform_0, window_bounds = array<i64: 1>}, {transform_indices = @transform_1, window_bounds = array<i64: 1>}, {transform_indices = @transform_2, window_bounds = array<i64: 512, 128>}, {transform_indices = @transform_3, window_bounds = array<i64: 512, 128>}]} {
    %c0 = arith.constant 0 : index
    %0 = memref.load %arg1[%c0] : memref<1xf32, #tpu.memory_space<smem>>
    %c0_0 = arith.constant 0 : index
    %1 = memref.load %arg2[%c0_0] : memref<1xf32, #tpu.memory_space<smem>>
    %c0_1 = arith.constant 0 : index
    %c0_2 = arith.constant 0 : index
    %2 = vector.load %arg3[%c0_1, %c0_2] : memref<512x128xf32, #tpu.memory_space<vmem>>, vector<512x128xf32>
    %3 = vector.broadcast %0 : f32 to vector<512x128xf32>
    %4 = arith.mulf %2, %3 : vector<512x128xf32>
    %5 = vector.broadcast %1 : f32 to vector<512x128xf32>
    %6 = arith.addf %4, %5 : vector<512x128xf32>
    %c0_3 = arith.constant 0 : index
    %c0_4 = arith.constant 0 : index
    %7 = vector.load %arg4[%c0_3, %c0_4] : memref<512x128xf32, #tpu.memory_space<vmem>>, vector<512x128xf32>
    tpu.vector_store %arg4[%c0_3, %c0_4], %6 {strides = array<i32>} : memref<512x128xf32, #tpu.memory_space<vmem>>, vector<512x128xf32>,
    return
  }
  func.func @transform_0(%arg0: i32) -> i32 {
    %c0_i32 = arith.constant 0 : i32
    %c0_i32_0 = arith.constant 0 : i32
    return %c0_i32 : i32
  }
  func.func @transform_1(%arg0: i32) -> i32 {
    %c0_i32 = arith.constant 0 : i32
    %c0_i32_0 = arith.constant 0 : i32
    return %c0_i32 : i32
  }
  func.func @transform_2(%arg0: i32) -> (i32, i32) {
    %c0_i32 = arith.constant 0 : i32
    %c0_i32_0 = arith.constant 0 : i32
    return %arg0, %c0_i32 : i32, i32
  }
  func.func @transform_3(%arg0: i32) -> (i32, i32) {
    %c0_i32 = arith.constant 0 : i32
    %c0_i32_0 = arith.constant 0 : i32
    return %arg0, %c0_i32 : i32, i32
  }
}

</mosaic_0001>

<llo_original>
// kernel: tpu_custom_call.1
$region0: #{tpu_custom_call.1}
  #allocation0 [shape = 'u32[]', space=smem, size = 0x4, offset = 0x4, fixed_abs, tag = 'smem constant byte address 0x4 - core index']
  #allocation1 [shape = 'u32[72,128]{1,0:T(1,128)}', space=vmem, size = 0x9000, scoped, tag = 'internal scratch']
  #allocation2 [shape = 'f32[1]{0:T(128)S(6)}', space=smem, size = 0x200, scoped, tag = 'scoped memory for tpu_custom_call.1']
  #allocation3 [shape = 'f32[1]{0:T(128)S(6)}', space=smem, size = 0x200, scoped, tag = 'scoped memory for tpu_custom_call.1']
  %s0 = inlined_call_operand.<no memory space> [shape: f32[1], index: 0, kind: input, shape index: {}]
  %s1 = inlined_call_operand.<no memory space> [shape: f32[1], index: 1, kind: input, shape index: {}]
  %s2 = inlined_call_operand.hbm [shape: f32[2048,128], index: 2, kind: input, shape index: {}]
  %s3 = inlined_call_operand.hbm [shape: f32[2048,128], index: 3, kind: output, shape index: {}]
  %s4 = sld [smem:[#allocation0]]
  $region49: #{tpu_custom_call.1} parent=0
    _
  %s6 = ssub.s32 1, %s4
  %s7 = scalar_select 0, %s6, %s4
  %8 = sst [smem:[#allocation2]] %s0
  %9 = sst [smem:[#allocation3]] %s1
  $region1: #{tpu_custom_call.1} parent=0
    #allocation4 [shape = 'u8[524288]{0}', space=vmem, size = 0x80000, scoped, tag = 'input window, operand 2']
    #allocation5 [shape = 's32[2]{0}', space=sflag, size = 0x8, scoped, tag = 'scoped memory for tpu_custom_call.1']
    #allocation6 [shape = 's32[2]{0}', space=sflag, size = 0x8, scoped, tag = 'scoped memory for tpu_custom_call.1']
    #allocation7 [shape = 'u8[524288]{0}', space=vmem, size = 0x80000, scoped, tag = 'output window, operand 0']
    %10 = vsyncpa [#allocation5], 0
    %s11 = scalar_lea.sflag [#allocation5], 1
    %12 = vsyncpa %s11, 0
    %13 = vsyncpa [#allocation6], 0
    %s14 = scalar_lea.sflag [#allocation6], 1
    %15 = vsyncpa %s14, 0
    loop: start=0, step=1, limit=6
    $region2: #{tpu_custom_call.1} parent=1 // loop_pre_header
      _
    $region3: #{tpu_custom_call.1} parent=1 // loop_header
      %s17 = sphi 0, %s21
      %p18 = scmp.ge.s32.totalorder %s17, 6
      %s25 = sphi 0, %s25
      %s27 = sphi 0, %s25
      %s28 = sphi 0, %s27
      %s42 = sphi 0, %s28
      %s46 = sphi 0, %s46
      %s48 = sphi 0, %s46
      %s49 = sphi 0, %s48
      %s63 = sphi 0, %s49
      %s69 = sphi 0, %s71
      %s72 = sphi 0, %s69
      %s73 = sphi 0, %s72
      %s89 = sphi 0, %s73
      %s95 = sphi 0, %s97
      %s98 = sphi 0, %s95
      %s99 = sphi 0, %s98
      %s115 = sphi 0, %s99
    $region4: #{tpu_custom_call.1} parent=1 // loop_header_branch
      %20 = sbr.rel (%p18) target = $region8
    $region5: #{tpu_custom_call.1} parent=1 // loop_body
      %s22 = ssub.s32 %s17, 1
      %s23 = ssub.s32 %s17, 2
      %s24 = sadd.s32 %s17, 1
      %s26 = sadd.s32 %s25, 1
      %p29 = scmp.eq.s32.totalorder %s17, 3
      %p30 = scmp.ne.s32.totalorder %s25, %s27
      %p31 = scmp.eq.s32.totalorder %s17, 0
      %p32 = por %p30, %p31
      %p33 = scmp.ne.s32.totalorder %s25, %s27
      %p34 = scmp.eq.s32.totalorder %s22, 3
      %p35 = por %p33, %p34
      %p36 = scmp.ne.s32.totalorder %s27, %s28
      %p37 = scmp.eq.s32.totalorder %s22, 0
      %p38 = por %p36, %p37
      %p39 = scmp.ne.s32.totalorder %s27, %s28
      %p40 = scmp.eq.s32.totalorder %s23, 3
      %p41 = por %p39, %p40
      %p43 = scmp.ne.s32.totalorder %s28, %s42
      %p44 = scmp.eq.s32.totalorder %s23, 0
      %p45 = por %p43, %p44
      %s47 = sadd.s32 %s46, 1
      %p50 = scmp.eq.s32.totalorder %s17, 3
      %p51 = scmp.ne.s32.totalorder %s46, %s48
      %p52 = scmp.eq.s32.totalorder %s17, 0
      %p53 = por %p51, %p52
      %p54 = scmp.ne.s32.totalorder %s46, %s48
      %p55 = scmp.eq.s32.totalorder %s22, 3
      %p56 = por %p54, %p55
      %p57 = scmp.ne.s32.totalorder %s48, %s49
      %p58 = scmp.eq.s32.totalorder %s22, 0
      %p59 = por %p57, %p58
      %p60 = scmp.ne.s32.totalorder %s48, %s49
      %p61 = scmp.eq.s32.totalorder %s23, 3
      %p62 = por %p60, %p61
      %p64 = scmp.ne.s32.totalorder %s49, %s63
      %p65 = scmp.eq.s32.totalorder %s23, 0
      %p66 = por %p64, %p65
      %s67 = ssub.s32 %s17, %s24
      %p68 = scmp.eq.s32.totalorder %s67, 0
      %s70 = sadd.s32 %s69, 1
      %s71 = scalar_select %p68, %s69, %s70
      %p74 = pneg %p68
      %p75 = scmp.eq.s32.totalorder %s17, 3
      %p76 = por %p74, %p75
      %p77 = scmp.ne.s32.totalorder %s69, %s72
      %p78 = scmp.eq.s32.totalorder %s17, 0
      %p79 = por %p77, %p78
      %p80 = scmp.ne.s32.totalorder %s69, %s72
      %p81 = scmp.eq.s32.totalorder %s22, 3
      %p82 = por %p80, %p81
      %p83 = scmp.ne.s32.totalorder %s72, %s73
      %p84 = scmp.eq.s32.totalorder %s22, 0
      %p85 = por %p83, %p84
      %p86 = scmp.ne.s32.totalorder %s72, %s73
      %p87 = scmp.eq.s32.totalorder %s23, 3
      %p88 = por %p86, %p87
      %p90 = scmp.ne.s32.totalorder %s73, %s89
      %p91 = scmp.eq.s32.totalorder %s23, 0
      %p92 = por %p90, %p91
      %s93 = ssub.s32 %s17, %s24
      %p94 = scmp.eq.s32.totalorder %s93, 0
      %s96 = sadd.s32 %s95, 1
      %s97 = scalar_select %p94, %s95, %s96
      %p100 = pneg %p94
      %p101 = scmp.eq.s32.totalorder %s17, 3
      %p102 = por %p100, %p101
      %p103 = scmp.ne.s32.totalorder %s95, %s98
      %p104 = scmp.eq.s32.totalorder %s17, 0
      %p105 = por %p103, %p104
      %p106 = scmp.ne.s32.totalorder %s95, %s98
      %p107 = scmp.eq.s32.totalorder %s22, 3
      %p108 = por %p106, %p107
      %p109 = scmp.ne.s32.totalorder %s98, %s99
      %p110 = scmp.eq.s32.totalorder %s22, 0
      %p111 = por %p109, %p110
      %p112 = scmp.ne.s32.totalorder %s98, %s99
      %p113 = scmp.eq.s32.totalorder %s23, 3
      %p114 = por %p112, %p113
      %p116 = scmp.ne.s32.totalorder %s99, %s115
      %p117 = scmp.eq.s32.totalorder %s23, 0
      %p118 = por %p116, %p117
      %p119 = scmp.le.s32.totalorder 1, %s17
      %p120 = scmp.lt.s32.totalorder %s17, 5
      %p121 = pnand %p119, %p120
      %p122 = pneg %p121
      // Predicated region
      $region9: #{tpu_custom_call.1} parent=5 // pred_check
        _
      $region10: #{tpu_custom_call.1} parent=5 // pred_check_branch
        %124 = sbr.rel (%p121) target = $region12
      $region11: #{tpu_custom_call.1} parent=5 // pred_region
        %s125 = ssub.s32 %s17, 1
        // Predicated region
        $region13: #{tpu_custom_call.1} parent=11 // pred_check
          %p126 = pneg %p38
        $region14: #{tpu_custom_call.1} parent=11 // pred_check_branch
          %128 = sbr.rel (%p126) target = $region16
        $region15: #{tpu_custom_call.1} parent=11 // pred_region
          _
        $region16: #{tpu_custom_call.1} parent=11 // pred_fallthru
          _
        // Predicated region
        $region17: #{tpu_custom_call.1} parent=11 // pred_check
          %p129 = pneg %p59
        $region18: #{tpu_custom_call.1} parent=11 // pred_check_branch
          %131 = sbr.rel (%p129) target = $region20
        $region19: #{tpu_custom_call.1} parent=11 // pred_region
          _
        $region20: #{tpu_custom_call.1} parent=11 // pred_fallthru
          _
      $region12: #{tpu_custom_call.1} parent=5 // pred_fallthru
        _
      %p132 = scmp.lt.s32.totalorder %s17, 4
      // Predicated region
      $region21: #{tpu_custom_call.1} parent=5 // pred_check
        %p133 = pneg %p132
      $region22: #{tpu_custom_call.1} parent=5 // pred_check_branch
        %135 = sbr.rel (%p133) target = $region24
      $region23: #{tpu_custom_call.1} parent=5 // pred_region
        // Predicated region
        $region25: #{tpu_custom_call.1} parent=23 // pred_check
          %p136 = pneg %p79
        $region26: #{tpu_custom_call.1} parent=23 // pred_check_branch
          %138 = sbr.rel (%p136) target = $region28
        $region27: #{tpu_custom_call.1} parent=23 // pred_region
          %s139 = sand.u32 %s69, 1
          %s140 = scalar_lea.sflag [#allocation5], %s139
          %s141 = sand.u32 %s69, 1
          %s142 = smul.addr %s141, 512
          %s143 = scalar_lea.vmem [#allocation4], %s142
          %s144 = smul.u32 64, %s17
          %146 = vsyncadd %s140, 0
          %s147 = smul.addr %s144, 8
          %s148 = scalar_lea.hbm %s2, %s147
          %s149 = sshll.u32 %s148, 4
          %s150 = int_to_ptr.hbm [resolvable:$true] %s149
          %s151 = sshll.u32 %s143, 4
          %s152 = int_to_ptr.vmem [resolvable:$true] %s151
          %157 = dma.hbm_to_vmem [thread:$0]  %s150, 8192, %s152, %s140, 128, 128, 8
        $region28: #{tpu_custom_call.1} parent=23 // pred_fallthru
          _
      $region24: #{tpu_custom_call.1} parent=5 // pred_fallthru
        _
      %p158 = scmp.le.s32.totalorder 1, %s17
      %p159 = scmp.lt.s32.totalorder %s17, 5
      %p160 = pnand %p158, %p159
      %p161 = pneg %p160
      // Predicated region
      $region29: #{tpu_custom_call.1} parent=5 // pred_check
        _
      $region30: #{tpu_custom_call.1} parent=5 // pred_check_branch
        %163 = sbr.rel (%p160) target = $region32
      $region31: #{tpu_custom_call.1} parent=5 // pred_region
        %s164 = ssub.s32 %s17, 1
        %s165 = sand.u32 %s72, 1
        %s166 = scalar_lea.sflag [#allocation5], %s165
        %s167 = sand.u32 %s72, 1
        %s168 = smul.addr %s167, 512
        %s169 = scalar_lea.vmem [#allocation4], %s168
        // Predicated region
        $region33: #{tpu_custom_call.1} parent=31 // pred_check
          %p170 = pneg %p85
        $region34: #{tpu_custom_call.1} parent=31 // pred_check_branch
          %172 = sbr.rel (%p170) target = $region36
        $region35: #{tpu_custom_call.1} parent=31 // pred_region
          %174 = dma.done %s166, 8192
        $region36: #{tpu_custom_call.1} parent=31 // pred_fallthru
          _
        %p175 = pneg %p38
        %p176 = pneg %p35
        %p177 = pneg %p59
        %p178 = pneg %p56
        %s179 = sand.u32 %s72, 1
        %s180 = scalar_lea.sflag [#allocation5], %s179
        %s181 = sand.u32 %s72, 1
        %s182 = smul.addr %s181, 512
        %s183 = scalar_lea.vmem [#allocation4], %s182
        %p184 = pneg %p85
        %p185 = pneg %p82
        %p186 = pneg %p111
        %p187 = pneg %p108
        %s188 = sand.u32 %s98, 1
        %s189 = scalar_lea.sflag [#allocation6], %s188
        %s190 = sand.u32 %s98, 1
        %s191 = smul.addr %s190, 512
        %s192 = scalar_lea.vmem [#allocation7], %s191
        %s193 = smul.u32 64, %s22
        %s194 = smul.u32 64, %s22
        %s195 = sld [smem:[#allocation2]]
        %s196 = sld [smem:[#allocation3]]
        %v197 = vld [vmem:[%s169] sm:$0xff]
        %v198 = vld [vmem:[%s169 + $0x8] sm:$0xff]
        %v199 = vld [vmem:[%s169 + $0x10] sm:$0xff]
        %v200 = vld [vmem:[%s169 + $0x18] sm:$0xff]
        %v201 = vld [vmem:[%s169 + $0x20] sm:$0xff]
        %v202 = vld [vmem:[%s169 + $0x28] sm:$0xff]
        %v203 = vld [vmem:[%s169 + $0x30] sm:$0xff]
        %v204 = vld [vmem:[%s169 + $0x38] sm:$0xff]
        %v205 = vld [vmem:[%s169 + $0x40] sm:$0xff]
        %v206 = vld [vmem:[%s169 + $0x48] sm:$0xff]
        %v207 = vld [vmem:[%s169 + $0x50] sm:$0xff]
        %v208 = vld [vmem:[%s169 + $0x58] sm:$0xff]
        %v209 = vld [vmem:[%s169 + $0x60] sm:$0xff]
        %v210 = vld [vmem:[%s169 + $0x68] sm:$0xff]
        %v211 = vld [vmem:[%s169 + $0x70] sm:$0xff]
        %v212 = vld [vmem:[%s169 + $0x78] sm:$0xff]
        %v213 = vld [vmem:[%s169 + $0x80] sm:$0xff]
        %v214 = vld [vmem:[%s169 + $0x88] sm:$0xff]
        %v215 = vld [vmem:[%s169 + $0x90] sm:$0xff]
        %v216 = vld [vmem:[%s169 + $0x98] sm:$0xff]
        %v217 = vld [vmem:[%s169 + $0xa0] sm:$0xff]
        %v218 = vld [vmem:[%s169 + $0xa8] sm:$0xff]
        %v219 = vld [vmem:[%s169 + $0xb0] sm:$0xff]
        %v220 = vld [vmem:[%s169 + $0xb8] sm:$0xff]
        %v221 = vld [vmem:[%s169 + $0xc0] sm:$0xff]
        %v222 = vld [vmem:[%s169 + $0xc8] sm:$0xff]
        %v223 = vld [vmem:[%s169 + $0xd0] sm:$0xff]
        %v224 = vld [vmem:[%s169 + $0xd8] sm:$0xff]
        %v225 = vld [vmem:[%s169 + $0xe0] sm:$0xff]
        %v226 = vld [vmem:[%s169 + $0xe8] sm:$0xff]
        %v227 = vld [vmem:[%s169 + $0xf0] sm:$0xff]
        %v228 = vld [vmem:[%s169 + $0xf8] sm:$0xff]
        %v229 = vld [vmem:[%s169 + $0x100] sm:$0xff]
        %v230 = vld [vmem:[%s169 + $0x108] sm:$0xff]
        %v231 = vld [vmem:[%s169 + $0x110] sm:$0xff]
        %v232 = vld [vmem:[%s169 + $0x118] sm:$0xff]
        %v233 = vld [vmem:[%s169 + $0x120] sm:$0xff]
        %v234 = vld [vmem:[%s169 + $0x128] sm:$0xff]
        %v235 = vld [vmem:[%s169 + $0x130] sm:$0xff]
        %v236 = vld [vmem:[%s169 + $0x138] sm:$0xff]
        %v237 = vld [vmem:[%s169 + $0x140] sm:$0xff]
        %v238 = vld [vmem:[%s169 + $0x148] sm:$0xff]
        %v239 = vld [vmem:[%s169 + $0x150] sm:$0xff]
        %v240 = vld [vmem:[%s169 + $0x158] sm:$0xff]
        %v241 = vld [vmem:[%s169 + $0x160] sm:$0xff]
        %v242 = vld [vmem:[%s169 + $0x168] sm:$0xff]
        %v243 = vld [vmem:[%s169 + $0x170] sm:$0xff]
        %v244 = vld [vmem:[%s169 + $0x178] sm:$0xff]
        %v245 = vld [vmem:[%s169 + $0x180] sm:$0xff]
        %v246 = vld [vmem:[%s169 + $0x188] sm:$0xff]
        %v247 = vld [vmem:[%s169 + $0x190] sm:$0xff]
        %v248 = vld [vmem:[%s169 + $0x198] sm:$0xff]
        %v249 = vld [vmem:[%s169 + $0x1a0] sm:$0xff]
        %v250 = vld [vmem:[%s169 + $0x1a8] sm:$0xff]
        %v251 = vld [vmem:[%s169 + $0x1b0] sm:$0xff]
        %v252 = vld [vmem:[%s169 + $0x1b8] sm:$0xff]
        %v253 = vld [vmem:[%s169 + $0x1c0] sm:$0xff]
        %v254 = vld [vmem:[%s169 + $0x1c8] sm:$0xff]
        %v255 = vld [vmem:[%s169 + $0x1d0] sm:$0xff]
        %v256 = vld [vmem:[%s169 + $0x1d8] sm:$0xff]
        %v257 = vld [vmem:[%s169 + $0x1e0] sm:$0xff]
        %v258 = vld [vmem:[%s169 + $0x1e8] sm:$0xff]
        %v259 = vld [vmem:[%s169 + $0x1f0] sm:$0xff]
        %v260 = vld [vmem:[%s169 + $0x1f8] sm:$0xff]
        %v261 = vstv %s195
        %v262 = vmul.f32 %v197, %v261
        %v263 = vmul.f32 %v198, %v261
        %v264 = vmul.f32 %v199, %v261
        %v265 = vmul.f32 %v200, %v261
        %v266 = vmul.f32 %v201, %v261
        %v267 = vmul.f32 %v202, %v261
        %v268 = vmul.f32 %v203, %v261
        %v269 = vmul.f32 %v204, %v261
        %v270 = vmul.f32 %v205, %v261
        %v271 = vmul.f32 %v206, %v261
        %v272 = vmul.f32 %v207, %v261
        %v273 = vmul.f32 %v208, %v261
        %v274 = vmul.f32 %v209, %v261
        %v275 = vmul.f32 %v210, %v261
        %v276 = vmul.f32 %v211, %v261
        %v277 = vmul.f32 %v212, %v261
        %v278 = vmul.f32 %v213, %v261
        %v279 = vmul.f32 %v214, %v261
        %v280 = vmul.f32 %v215, %v261
        %v281 = vmul.f32 %v216, %v261
        %v282 = vmul.f32 %v217, %v261
        %v283 = vmul.f32 %v218, %v261
        %v284 = vmul.f32 %v219, %v261
        %v285 = vmul.f32 %v220, %v261
        %v286 = vmul.f32 %v221, %v261
        %v287 = vmul.f32 %v222, %v261
        %v288 = vmul.f32 %v223, %v261
        %v289 = vmul.f32 %v224, %v261
        %v290 = vmul.f32 %v225, %v261
        %v291 = vmul.f32 %v226, %v261
        %v292 = vmul.f32 %v227, %v261
        %v293 = vmul.f32 %v228, %v261
        %v294 = vmul.f32 %v229, %v261
        %v295 = vmul.f32 %v230, %v261
        %v296 = vmul.f32 %v231, %v261
        %v297 = vmul.f32 %v232, %v261
        %v298 = vmul.f32 %v233, %v261
        %v299 = vmul.f32 %v234, %v261
        %v300 = vmul.f32 %v235, %v261
        %v301 = vmul.f32 %v236, %v261
        %v302 = vmul.f32 %v237, %v261
        %v303 = vmul.f32 %v238, %v261
        %v304 = vmul.f32 %v239, %v261
        %v305 = vmul.f32 %v240, %v261
        %v306 = vmul.f32 %v241, %v261
        %v307 = vmul.f32 %v242, %v261
        %v308 = vmul.f32 %v243, %v261
        %v309 = vmul.f32 %v244, %v261
        %v310 = vmul.f32 %v245, %v261
        %v311 = vmul.f32 %v246, %v261
        %v312 = vmul.f32 %v247, %v261
        %v313 = vmul.f32 %v248, %v261
        %v314 = vmul.f32 %v249, %v261
        %v315 = vmul.f32 %v250, %v261
        %v316 = vmul.f32 %v251, %v261
        %v317 = vmul.f32 %v252, %v261
        %v318 = vmul.f32 %v253, %v261
        %v319 = vmul.f32 %v254, %v261
        %v320 = vmul.f32 %v255, %v261
        %v321 = vmul.f32 %v256, %v261
        %v322 = vmul.f32 %v257, %v261
        %v323 = vmul.f32 %v258, %v261
        %v324 = vmul.f32 %v259, %v261
        %v325 = vmul.f32 %v260, %v261
        %v326 = vstv %s196
        %v327 = vadd.f32 %v262, %v326
        %v328 = vadd.f32 %v263, %v326
        %v329 = vadd.f32 %v264, %v326
        %v330 = vadd.f32 %v265, %v326
        %v331 = vadd.f32 %v266, %v326
        %v332 = vadd.f32 %v267, %v326
        %v333 = vadd.f32 %v268, %v326
        %v334 = vadd.f32 %v269, %v326
        %v335 = vadd.f32 %v270, %v326
        %v336 = vadd.f32 %v271, %v326
        %v337 = vadd.f32 %v272, %v326
        %v338 = vadd.f32 %v273, %v326
        %v339 = vadd.f32 %v274, %v326
        %v340 = vadd.f32 %v275, %v326
        %v341 = vadd.f32 %v276, %v326
        %v342 = vadd.f32 %v277, %v326
        %v343 = vadd.f32 %v278, %v326
        %v344 = vadd.f32 %v279, %v326
        %v345 = vadd.f32 %v280, %v326
        %v346 = vadd.f32 %v281, %v326
        %v347 = vadd.f32 %v282, %v326
        %v348 = vadd.f32 %v283, %v326
        %v349 = vadd.f32 %v284, %v326
        %v350 = vadd.f32 %v285, %v326
        %v351 = vadd.f32 %v286, %v326
        %v352 = vadd.f32 %v287, %v326
        %v353 = vadd.f32 %v288, %v326
        %v354 = vadd.f32 %v289, %v326
        %v355 = vadd.f32 %v290, %v326
        %v356 = vadd.f32 %v291, %v326
        %v357 = vadd.f32 %v292, %v326
        %v358 = vadd.f32 %v293, %v326
        %v359 = vadd.f32 %v294, %v326
        %v360 = vadd.f32 %v295, %v326
        %v361 = vadd.f32 %v296, %v326
        %v362 = vadd.f32 %v297, %v326
        %v363 = vadd.f32 %v298, %v326
        %v364 = vadd.f32 %v299, %v326
        %v365 = vadd.f32 %v300, %v326
        %v366 = vadd.f32 %v301, %v326
        %v367 = vadd.f32 %v302, %v326
        %v368 = vadd.f32 %v303, %v326
        %v369 = vadd.f32 %v304, %v326
        %v370 = vadd.f32 %v305, %v326
        %v371 = vadd.f32 %v306, %v326
        %v372 = vadd.f32 %v307, %v326
        %v373 = vadd.f32 %v308, %v326
        %v374 = vadd.f32 %v309, %v326
        %v375 = vadd.f32 %v310, %v326
        %v376 = vadd.f32 %v311, %v326
        %v377 = vadd.f32 %v312, %v326
        %v378 = vadd.f32 %v313, %v326
        %v379 = vadd.f32 %v314, %v326
        %v380 = vadd.f32 %v315, %v326
        %v381 = vadd.f32 %v316, %v326
        %v382 = vadd.f32 %v317, %v326
        %v383 = vadd.f32 %v318, %v326
        %v384 = vadd.f32 %v319, %v326
        %v385 = vadd.f32 %v320, %v326
        %v386 = vadd.f32 %v321, %v326
        %v387 = vadd.f32 %v322, %v326
        %v388 = vadd.f32 %v323, %v326
        %v389 = vadd.f32 %v324, %v326
        %v390 = vadd.f32 %v325, %v326
        %391 = vst [vmem:[%s192] sm:$0xff] %v327
        %392 = vst [vmem:[%s192 + $0x8] sm:$0xff] %v328
        %393 = vst [vmem:[%s192 + $0x10] sm:$0xff] %v329
        %394 = vst [vmem:[%s192 + $0x18] sm:$0xff] %v330
        %395 = vst [vmem:[%s192 + $0x20] sm:$0xff] %v331
        %396 = vst [vmem:[%s192 + $0x28] sm:$0xff] %v332
        %397 = vst [vmem:[%s192 + $0x30] sm:$0xff] %v333
        %398 = vst [vmem:[%s192 + $0x38] sm:$0xff] %v334
        %399 = vst [vmem:[%s192 + $0x40] sm:$0xff] %v335
        %400 = vst [vmem:[%s192 + $0x48] sm:$0xff] %v336
        %401 = vst [vmem:[%s192 + $0x50] sm:$0xff] %v337
        %402 = vst [vmem:[%s192 + $0x58] sm:$0xff] %v338
        %403 = vst [vmem:[%s192 + $0x60] sm:$0xff] %v339
        %404 = vst [vmem:[%s192 + $0x68] sm:$0xff] %v340
        %405 = vst [vmem:[%s192 + $0x70] sm:$0xff] %v341
        %406 = vst [vmem:[%s192 + $0x78] sm:$0xff] %v342
        %407 = vst [vmem:[%s192 + $0x80] sm:$0xff] %v343
        %408 = vst [vmem:[%s192 + $0x88] sm:$0xff] %v344
        %409 = vst [vmem:[%s192 + $0x90] sm:$0xff] %v345
        %410 = vst [vmem:[%s192 + $0x98] sm:$0xff] %v346
        %411 = vst [vmem:[%s192 + $0xa0] sm:$0xff] %v347
        %412 = vst [vmem:[%s192 + $0xa8] sm:$0xff] %v348
        %413 = vst [vmem:[%s192 + $0xb0] sm:$0xff] %v349
        %414 = vst [vmem:[%s192 + $0xb8] sm:$0xff] %v350
        %415 = vst [vmem:[%s192 + $0xc0] sm:$0xff] %v351
        %416 = vst [vmem:[%s192 + $0xc8] sm:$0xff] %v352
        %417 = vst [vmem:[%s192 + $0xd0] sm:$0xff] %v353
        %418 = vst [vmem:[%s192 + $0xd8] sm:$0xff] %v354
        %419 = vst [vmem:[%s192 + $0xe0] sm:$0xff] %v355
        %420 = vst [vmem:[%s192 + $0xe8] sm:$0xff] %v356
        %421 = vst [vmem:[%s192 + $0xf0] sm:$0xff] %v357
        %422 = vst [vmem:[%s192 + $0xf8] sm:$0xff] %v358
        %423 = vst [vmem:[%s192 + $0x100] sm:$0xff] %v359
        %424 = vst [vmem:[%s192 + $0x108] sm:$0xff] %v360
        %425 = vst [vmem:[%s192 + $0x110] sm:$0xff] %v361
        %426 = vst [vmem:[%s192 + $0x118] sm:$0xff] %v362
        %427 = vst [vmem:[%s192 + $0x120] sm:$0xff] %v363
        %428 = vst [vmem:[%s192 + $0x128] sm:$0xff] %v364
        %429 = vst [vmem:[%s192 + $0x130] sm:$0xff] %v365
        %430 = vst [vmem:[%s192 + $0x138] sm:$0xff] %v366
        %431 = vst [vmem:[%s192 + $0x140] sm:$0xff] %v367
        %432 = vst [vmem:[%s192 + $0x148] sm:$0xff] %v368
        %433 = vst [vmem:[%s192 + $0x150] sm:$0xff] %v369
        %434 = vst [vmem:[%s192 + $0x158] sm:$0xff] %v370
        %435 = vst [vmem:[%s192 + $0x160] sm:$0xff] %v371
        %436 = vst [vmem:[%s192 + $0x168] sm:$0xff] %v372
        %437 = vst [vmem:[%s192 + $0x170] sm:$0xff] %v373
        %438 = vst [vmem:[%s192 + $0x178] sm:$0xff] %v374
        %439 = vst [vmem:[%s192 + $0x180] sm:$0xff] %v375
        %440 = vst [vmem:[%s192 + $0x188] sm:$0xff] %v376
        %441 = vst [vmem:[%s192 + $0x190] sm:$0xff] %v377
        %442 = vst [vmem:[%s192 + $0x198] sm:$0xff] %v378
        %443 = vst [vmem:[%s192 + $0x1a0] sm:$0xff] %v379
        %444 = vst [vmem:[%s192 + $0x1a8] sm:$0xff] %v380
        %445 = vst [vmem:[%s192 + $0x1b0] sm:$0xff] %v381
        %446 = vst [vmem:[%s192 + $0x1b8] sm:$0xff] %v382
        %447 = vst [vmem:[%s192 + $0x1c0] sm:$0xff] %v383
        %448 = vst [vmem:[%s192 + $0x1c8] sm:$0xff] %v384
        %449 = vst [vmem:[%s192 + $0x1d0] sm:$0xff] %v385
        %450 = vst [vmem:[%s192 + $0x1d8] sm:$0xff] %v386
        %451 = vst [vmem:[%s192 + $0x1e0] sm:$0xff] %v387
        %452 = vst [vmem:[%s192 + $0x1e8] sm:$0xff] %v388
        %453 = vst [vmem:[%s192 + $0x1f0] sm:$0xff] %v389
        %454 = vst [vmem:[%s192 + $0x1f8] sm:$0xff] %v390
        %s455 = sand.u32 %s98, 1
        %s456 = scalar_lea.sflag [#allocation6], %s455
        %s457 = sand.u32 %s98, 1
        %s458 = smul.addr %s457, 512
        %s459 = scalar_lea.vmem [#allocation7], %s458
        // Predicated region
        $region37: #{tpu_custom_call.1} parent=31 // pred_check
          %p460 = pneg %p108
        $region38: #{tpu_custom_call.1} parent=31 // pred_check_branch
          %462 = sbr.rel (%p460) target = $region40
        $region39: #{tpu_custom_call.1} parent=31 // pred_region
          %s463 = smul.u32 64, %s22
          %465 = vsyncadd %s456, 0
          %s466 = smul.addr %s463, 8
          %s467 = scalar_lea.hbm %s3, %s466
          %s468 = sshll.u32 %s459, 4
          %s469 = int_to_ptr.vmem [resolvable:$true] %s468
          %s470 = sshll.u32 %s467, 4
          %s471 = int_to_ptr.hbm [resolvable:$true] %s470
          %476 = dma.vmem_to_hbm [thread:$0]  %s469, 8192, %s471, %s456, 128, 128, 8
        $region40: #{tpu_custom_call.1} parent=31 // pred_fallthru
          _
      $region32: #{tpu_custom_call.1} parent=5 // pred_fallthru
        _
      %p477 = scmp.le.s32.totalorder 2, %s17
      // Predicated region
      $region41: #{tpu_custom_call.1} parent=5 // pred_check
        %p478 = pneg %p477
      $region42: #{tpu_custom_call.1} parent=5 // pred_check_branch
        %480 = sbr.rel (%p478) target = $region44
      $region43: #{tpu_custom_call.1} parent=5 // pred_region
        %s481 = ssub.s32 %s17, 2
        // Predicated region
        $region45: #{tpu_custom_call.1} parent=43 // pred_check
          %p482 = pneg %p114
        $region46: #{tpu_custom_call.1} parent=43 // pred_check_branch
          %484 = sbr.rel (%p482) target = $region48
        $region47: #{tpu_custom_call.1} parent=43 // pred_region
          %s485 = sand.u32 %s99, 1
          %s486 = scalar_lea.sflag [#allocation6], %s485
          %s487 = sand.u32 %s99, 1
          %s488 = smul.addr %s487, 512
          %s489 = scalar_lea.vmem [#allocation7], %s488
          %491 = dma.done %s486, 8192
        $region48: #{tpu_custom_call.1} parent=43 // pred_fallthru
          _
      $region44: #{tpu_custom_call.1} parent=5 // pred_fallthru
        _
    $region6: #{tpu_custom_call.1} parent=1 // loop_footer
      %s21 = sadd.s32 1, %s17
    $region7: #{tpu_custom_call.1} parent=1 // loop_footer_branch
      %16 = sbr.rel target = $region3
    $region8: #{tpu_custom_call.1} parent=1 // loop_exit
      _
    %492 = vsyncpa [#allocation5], 1
    %s493 = scalar_lea.sflag [#allocation5], 1
    %494 = vsyncpa %s493, 1
    %495 = vsyncpa [#allocation6], 1
    %s496 = scalar_lea.sflag [#allocation6], 1
    %497 = vsyncpa %s496, 1

</llo_original>
